<compile_context>
chip_gen: v7x
topology: tpu7x:2x2x1
jax: 0.10.0
libtpu: 0.0.40
codegen_flags: <defaults>
</compile_context>

<pallas_src>
import functools

import jax
import jax.numpy as jnp
from jax.experimental import pallas as pl
from jax.experimental.pallas import tpu as pltpu

LANES = 128
SUBLANES = 8
DEFAULT_BLOCK_BYTES = 4 * 1024 * 1024   # per input per block (8192 f32 rows)
DEFAULT_NUM_CHUNKS = 1                  # 1 on v5e/v6e; set 2 on v7x (2 TCs)


def _charbonnier_kernel(x_ref, y_ref, out_ref, acc_ref, *,
                        eps, inner_steps, valid_steps, fold_rows, guard):
    s = pl.program_id(1)   # step within chunk (sequential reduction axis)

    @pl.when(s == 0)
    def _():
        acc_ref[...] = jnp.zeros_like(acc_ref)

    def accumulate():
        diff = x_ref[...].astype(jnp.float32) - y_ref[...].astype(jnp.float32)
        if eps == 0.0:
            # Fast path: sqrt(d*d + 0) == |d|; one VPU bit-op, no EUP.
            val = jnp.abs(diff)
        else:
            val = jnp.sqrt(diff * diff + jnp.float32(eps))
        if fold_rows == SUBLANES:
            # Layout-aligned fold onto an (8,128) vreg-shaped accumulator:
            # plain VPU adds across vregs, no cross-lane reduce.
            acc_ref[...] += val.reshape(-1, SUBLANES, LANES).sum(axis=0)
        else:
            # Tiny / oddly-sized single block: small sublane reduce is fine.
            acc_ref[...] += jnp.sum(val, axis=0, keepdims=True)

    if guard:
        # Only needed when num_chunks does not divide the step count; the
        # clamped index_map makes out-of-range steps re-read a valid block
        # and this guard makes them no-ops.
        c = pl.program_id(0)
        pl.when(c * inner_steps + s < valid_steps)(accumulate)
    else:
        accumulate()

    @pl.when(s == inner_steps - 1)
    def _():
        out_ref[0] = acc_ref[...]


def charbonnier_loss(x, y, eps=0.0, *,
                     target_block_bytes=DEFAULT_BLOCK_BYTES,
                     num_chunks=DEFAULT_NUM_CHUNKS):
    """Charbonnier loss: mean(sqrt((x - y)^2 + eps)). Returns a scalar f32."""
    assert x.shape == y.shape, "x and y must have the same shape"
    assert x.dtype == y.dtype, "x and y must have the same dtype"
    eps = float(eps)
    n_total = int(x.size)
    itemsize = jnp.dtype(x.dtype).itemsize
    # Sublane packing per dtype: 8 rows f32, 16 rows bf16, 32 rows int8/fp8.
    packing = SUBLANES * max(1, 4 // itemsize)

    # --- lane-dense 2D view ---------------------------------------------------
    xf = x.reshape(-1)
    yf = y.reshape(-1)
    pad = (-n_total) % LANES
    if pad:
        # Only ragged (non-multiple-of-128) sizes pay this copy; pad elements
        # are exact zeros and their contribution is corrected below.
        # TODO(synk): a manual-DMA prefix/tail split would remove this copy.
        xf = jnp.pad(xf, (0, pad))
        yf = jnp.pad(yf, (0, pad))
    rows = (n_total + pad) // LANES
    x2 = xf.reshape(rows, LANES)        # free reshape (layout-preserving)
    y2 = yf.reshape(rows, LANES)

    # --- choose block rows ------------------------------------------------------
    br_default = max(packing,
                     (target_block_bytes // (LANES * itemsize)) // packing * packing)
    if rows <= br_default:
        br = rows                        # single full-array block (always legal)
    else:
        br = br_default                  # multiple of dtype packing
    steps = rows // br                   # full blocks covered by the kernel
    tail_rows = rows - steps * br        # (< br) leftover rows -> plain jnp
    fold_rows = SUBLANES if (br % SUBLANES == 0) else 1

    # --- chunking over TensorCores (v7x) ----------------------------------------
    num_chunks = max(1, min(int(num_chunks), steps))
    inner_steps = pl.cdiv(steps, num_chunks)
    guard = (inner_steps * num_chunks != steps)

    if guard:
        def in_map(c, s):
            g = c * inner_steps + s
            return (jnp.minimum(g, steps - 1), 0)
    else:
        def in_map(c, s):
            return (c * inner_steps + s, 0)

    kernel = functools.partial(
        _charbonnier_kernel,
        eps=eps,
        inner_steps=inner_steps,
        valid_steps=steps,
        fold_rows=fold_rows,
        guard=guard,
    )

    kernel_elems = steps * br * LANES
    cost = pl.CostEstimate(
        flops=(3 if eps == 0.0 else 4) * kernel_elems,
        transcendentals=0 if eps == 0.0 else kernel_elems,
        bytes_accessed=2 * kernel_elems * itemsize
        + num_chunks * fold_rows * LANES * 4,
    )

    block_bytes = br * LANES * itemsize
    # 2 inputs x 2 pipeline buffers + headroom; always below physical VMEM.
    vmem_limit = min(64 * 1024 * 1024, 4 * block_bytes + 8 * 1024 * 1024)

    dim_sems = (
        pltpu.CORE_PARALLEL if num_chunks > 1 else pltpu.ARBITRARY,  # chunk axis
        pltpu.ARBITRARY,                                             # reduction axis
    )

    partials = pl.pallas_call(
        kernel,
        out_shape=jax.ShapeDtypeStruct((num_chunks, fold_rows, LANES), jnp.float32),
        grid_spec=pltpu.PrefetchScalarGridSpec(
            num_scalar_prefetch=0,
            grid=(num_chunks, inner_steps),
            in_specs=[
                pl.BlockSpec((br, LANES), in_map),
                pl.BlockSpec((br, LANES), in_map),
            ],
            out_specs=pl.BlockSpec((1, fold_rows, LANES), lambda c, s: (c, 0, 0)),
            scratch_shapes=[pltpu.VMEM((fold_rows, LANES), jnp.float32)],
        ),
        compiler_params=pltpu.CompilerParams(
            dimension_semantics=dim_sems,
            vmem_limit_bytes=vmem_limit,
        ),
        cost_estimate=cost,
    )(x2, y2)

    total = jnp.sum(partials)

    # Leftover rows not covered by full kernel blocks: tiny, reduce with jnp.
    if tail_rows:
        dt = (x2[steps * br:].astype(jnp.float32)
              - y2[steps * br:].astype(jnp.float32))
        tail_val = jnp.abs(dt) if eps == 0.0 else jnp.sqrt(dt * dt + jnp.float32(eps))
        total = total + jnp.sum(tail_val)

    # Exact correction for zero-padded elements (each contributes sqrt(eps)).
    if pad and eps != 0.0:
        total = total - jnp.float32(pad * (eps ** 0.5))

    return total / jnp.float32(n_total)


if __name__ == "__main__":
    key = jax.random.PRNGKey(0)
    kx, ky = jax.random.split(key)

    # NCHW, small shapes consistent with the DnCNN training loss:
    # batch=2, channels=4, spatial=16x16.
    x = jax.random.normal(kx, (2, 4, 16, 16), dtype=jnp.float32)
    y = jax.random.normal(ky, (2, 4, 16, 16), dtype=jnp.float32)

    # 1) Default path: eps=0 (PyTorch default) -> abs fast path, single block.
    eps = 0.0
    loss = jax.block_until_ready(charbonnier_loss(x, y, eps=eps))
    ref = jnp.mean(jnp.sqrt((x - y) * (x - y) + eps))
    assert jnp.allclose(loss, ref, rtol=1e-5, atol=1e-6), (loss, ref)

    # 2) Ragged size (not a multiple of 128) with eps > 0: exercises the
    #    pad + wrapper-side sqrt(eps) correction path.
    kx2, ky2 = jax.random.split(ky)
    x2 = jax.random.normal(kx2, (3, 4, 11, 7), dtype=jnp.float32)
    y2 = jax.random.normal(ky2, (3, 4, 11, 7), dtype=jnp.float32)
    eps2 = 1e-3
    loss2 = jax.block_until_ready(charbonnier_loss(x2, y2, eps=eps2))
    ref2 = jnp.mean(jnp.sqrt((x2 - y2) * (x2 - y2) + eps2))
    assert jnp.allclose(loss2, ref2, rtol=1e-5, atol=1e-6), (loss2, ref2)

    # 3) Small block size forces a multi-step sequential reduction in-kernel.
    loss3 = jax.block_until_ready(
        charbonnier_loss(x, y, eps=1e-4, target_block_bytes=4096))
    ref3 = jnp.mean(jnp.sqrt((x - y) * (x - y) + 1e-4))
    assert jnp.allclose(loss3, ref3, rtol=1e-5, atol=1e-6), (loss3, ref3)

    # 4) Rows not divisible by the block -> jnp tail path (no padding copy).
    kx4, ky4 = jax.random.split(ky2)
    x4 = jax.random.normal(kx4, (2, 4, 16, 24), dtype=jnp.float32)   # 3072 elems
    y4 = jax.random.normal(ky4, (2, 4, 16, 24), dtype=jnp.float32)
    loss4 = jax.block_until_ready(
        charbonnier_loss(x4, y4, eps=0.0, target_block_bytes=8192))
    ref4 = jnp.mean(jnp.abs(x4 - y4))
    assert jnp.allclose(loss4, ref4, rtol=1e-5, atol=1e-6), (loss4, ref4)

    print("KERNEL_OK")
</pallas_src>

<mosaic_0001>
module attributes {stable_mosaic.version = 11 : i64} {
  func.func @_charbonnier_kernel(%arg0: i32, %arg1: i32, %arg2: memref<16x128xf32, #tpu.memory_space<vmem>>, %arg3: memref<16x128xf32, #tpu.memory_space<vmem>>, %arg4: memref<1x8x128xf32, #tpu.memory_space<vmem>>, %arg5: memref<8x128xf32, #tpu.memory_space<vmem>>) attributes {dimension_semantics = [#tpu.dimension_semantics<arbitrary>, #tpu.dimension_semantics<arbitrary>], iteration_bounds = array<i64: 1, 1>, scalar_prefetch = 0 : i64, scratch_operands = 1 : i64, tpu.core_type = #tpu.core_type<tc>, window_params = [{transform_indices = @transform_0, window_bounds = array<i64: 16, 128>}, {transform_indices = @transform_1, window_bounds = array<i64: 16, 128>}, {transform_indices = @transform_2, window_bounds = array<i64: 1, 8, 128>}]} {
    %c0_i32 = arith.constant 0 : i32
    %0 = arith.cmpi eq, %arg1, %c0_i32 : i32
    %1 = arith.extui %0 : i1 to i32
    %c0_i32_0 = arith.constant 0 : i32
    %2 = arith.cmpi ne, %1, %c0_i32_0 : i32
    scf.if %2 {
      %cst_10 = arith.constant 0.000000e+00 : f32
      %15 = vector.broadcast %cst_10 : f32 to vector<8x128xf32>
      %c0_11 = arith.constant 0 : index
      %c0_12 = arith.constant 0 : index
      %16 = vector.load %arg5[%c0_11, %c0_12] : memref<8x128xf32, #tpu.memory_space<vmem>>, vector<8x128xf32>
      tpu.vector_store %arg5[%c0_11, %c0_12], %15 {strides = array<i32>} : memref<8x128xf32, #tpu.memory_space<vmem>>, vector<8x128xf32>,
    } else {
    }
    %c0 = arith.constant 0 : index
    %c0_1 = arith.constant 0 : index
    %3 = vector.load %arg2[%c0, %c0_1] : memref<16x128xf32, #tpu.memory_space<vmem>>, vector<16x128xf32>
    %c0_2 = arith.constant 0 : index
    %c0_3 = arith.constant 0 : index
    %4 = vector.load %arg3[%c0_2, %c0_3] : memref<16x128xf32, #tpu.memory_space<vmem>>, vector<16x128xf32>
    %5 = arith.subf %3, %4 : vector<16x128xf32>
    %6 = math.absf %5 : vector<16x128xf32>
    %c0_4 = arith.constant 0 : index
    %c0_5 = arith.constant 0 : index
    %7 = vector.load %arg5[%c0_4, %c0_5] : memref<8x128xf32, #tpu.memory_space<vmem>>, vector<8x128xf32>
    %8 = vector.shape_cast %6 : vector<16x128xf32> to vector<2x8x128xf32>
    %cst = arith.constant dense<0.000000e+00> : vector<8x128xf32>
    %9 = vector.multi_reduction <add>, %8, %cst [0] : vector<2x8x128xf32> to vector<8x128xf32>
    %10 = arith.addf %7, %9 : vector<8x128xf32>
    %c0_6 = arith.constant 0 : index
    %c0_7 = arith.constant 0 : index
    %11 = vector.load %arg5[%c0_6, %c0_7] : memref<8x128xf32, #tpu.memory_space<vmem>>, vector<8x128xf32>
    tpu.vector_store %arg5[%c0_6, %c0_7], %10 {strides = array<i32>} : memref<8x128xf32, #tpu.memory_space<vmem>>, vector<8x128xf32>,
    %c0_i32_8 = arith.constant 0 : i32
    %12 = arith.cmpi eq, %arg1, %c0_i32_8 : i32
    %13 = arith.extui %12 : i1 to i32
    %c0_i32_9 = arith.constant 0 : i32
    %14 = arith.cmpi ne, %13, %c0_i32_9 : i32
    scf.if %14 {
      %c0_10 = arith.constant 0 : index
      %c0_11 = arith.constant 0 : index
      %15 = vector.load %arg5[%c0_10, %c0_11] : memref<8x128xf32, #tpu.memory_space<vmem>>, vector<8x128xf32>
      %c0_12 = arith.constant 0 : index
      %c0_13 = arith.constant 0 : index
      %c0_14 = arith.constant 0 : index
      %16 = vector.load %arg4[%c0_12, %c0_13, %c0_14] : memref<1x8x128xf32, #tpu.memory_space<vmem>>, vector<1x8x128xf32>
      %17 = vector.shape_cast %16 : vector<1x8x128xf32> to vector<8x128xf32>
      %18 = vector.shape_cast %15 : vector<8x128xf32> to vector<1x8x128xf32>
      tpu.vector_store %arg4[%c0_12, %c0_13, %c0_14], %18 {strides = array<i32>} : memref<1x8x128xf32, #tpu.memory_space<vmem>>, vector<1x8x128xf32>,
    } else {
    }
    return
  }
  func.func @transform_0(%arg0: i32, %arg1: i32) -> (i32, i32) {
    %c1_i32 = arith.constant 1 : i32
    %0 = arith.muli %arg0, %c1_i32 : i32
    %1 = arith.addi %0, %arg1 : i32
    %c0_i32 = arith.constant 0 : i32
    %c0_i32_0 = arith.constant 0 : i32
    return %1, %c0_i32 : i32, i32
  }
  func.func @transform_1(%arg0: i32, %arg1: i32) -> (i32, i32) {
    %c1_i32 = arith.constant 1 : i32
    %0 = arith.muli %arg0, %c1_i32 : i32
    %1 = arith.addi %0, %arg1 : i32
    %c0_i32 = arith.constant 0 : i32
    %c0_i32_0 = arith.constant 0 : i32
    return %1, %c0_i32 : i32, i32
  }
  func.func @transform_2(%arg0: i32, %arg1: i32) -> (i32, i32, i32) {
    %c0_i32 = arith.constant 0 : i32
    %c0_i32_0 = arith.constant 0 : i32
    %c0_i32_1 = arith.constant 0 : i32
    return %arg0, %c0_i32, %c0_i32_0 : i32, i32, i32
  }
}

</mosaic_0001>

<llo_original>
// kernel: tpu_custom_call.1
$region0: #{tpu_custom_call.1}
  #allocation0 [shape = 'u32[]', space=smem, size = 0x4, offset = 0x4, fixed_abs, tag = 'smem constant byte address 0x4 - core index']
  #allocation1 [shape = 'u32[144,128]{1,0:T(1,128)}', space=vmem, size = 0x12000, scoped, tag = 'internal scratch']
  #allocation2 [shape = 'f32[8,128]{1,0:T(8,128)}', space=vmem, size = 0x1000, scoped, tag = 'scratch operand']
  %s0 = inlined_call_operand.hbm [shape: f32[16,128], index: 0, kind: input, shape index: {}]
  %s1 = inlined_call_operand.hbm [shape: f32[16,128], index: 1, kind: input, shape index: {}]
  %s2 = inlined_call_operand.hbm [shape: f32[1,8,128], index: 2, kind: output, shape index: {}]
  %s3 = sld [smem:[#allocation0]]
  $region34: #{tpu_custom_call.1} parent=0
    _
  %s5 = ssub.s32 1, %s3
  %s6 = scalar_select 0, %s5, %s3
  $region1: #{tpu_custom_call.1} parent=0
    #allocation3 [shape = 'u8[8192]{0}', space=vmem, size = 0x2000, scoped, tag = 'input window, operand 0, single buffered']
    #allocation4 [shape = 's32[1]{0}', space=sflag, size = 0x4, scoped, tag = 'scoped memory for tpu_custom_call.1']
    #allocation5 [shape = 's32[1]{0}', space=sflag, size = 0x4, scoped, tag = 'scoped memory for tpu_custom_call.1']
    #allocation6 [shape = 'u8[8192]{0}', space=vmem, size = 0x2000, scoped, tag = 'input window, operand 1, single buffered']
    #allocation7 [shape = 's32[1]{0}', space=sflag, size = 0x4, scoped, tag = 'scoped memory for tpu_custom_call.1']
    #allocation8 [shape = 'u8[4096]{0}', space=vmem, size = 0x1000, scoped, tag = 'output window, operand 0, single buffered']
    %7 = vsyncpa [#allocation4], 0
    %8 = vsyncpa [#allocation7], 0
    %9 = vsyncpa [#allocation5], 0
    // Predicated region
    $region2: #{tpu_custom_call.1} parent=1 // pred_check
      _
    $region3: #{tpu_custom_call.1} parent=1 // pred_check_branch
      %11 = sbr.rel (0) target = $region5
    $region4: #{tpu_custom_call.1} parent=1 // pred_region
      %s12 = sadd.s32 0, 0
      %s13 = smul.u32 2, %s12
      %s15 = ssub.s32 256, 256
      %16 = vsyncadd [#allocation4], %s15
      %s17 = smul.addr %s13, 128
      %s18 = scalar_lea.hbm %s0, %s17
      %s19 = sshll.u32 [#allocation3], 4
      %s20 = int_to_ptr.vmem [resolvable:$true] %s19
      %25 = dma.hbm_to_vmem [thread:$0]  %s18, 256, %s20, [#allocation4], 128, 128, 8
    $region5: #{tpu_custom_call.1} parent=1 // pred_fallthru
      _
    // Predicated region
    $region6: #{tpu_custom_call.1} parent=1 // pred_check
      _
    $region7: #{tpu_custom_call.1} parent=1 // pred_check_branch
      %27 = sbr.rel (0) target = $region9
    $region8: #{tpu_custom_call.1} parent=1 // pred_region
      %s28 = sadd.s32 0, 0
      %s29 = smul.u32 2, %s28
      %s31 = ssub.s32 256, 256
      %32 = vsyncadd [#allocation7], %s31
      %s33 = smul.addr %s29, 128
      %s34 = scalar_lea.hbm %s1, %s33
      %s35 = sshll.u32 [#allocation6], 4
      %s36 = int_to_ptr.vmem [resolvable:$true] %s35
      %41 = dma.hbm_to_vmem [thread:$0]  %s34, 256, %s36, [#allocation7], 128, 128, 8
    $region9: #{tpu_custom_call.1} parent=1 // pred_fallthru
      _
    // Predicated region
    $region10: #{tpu_custom_call.1} parent=1 // pred_check
      _
    $region11: #{tpu_custom_call.1} parent=1 // pred_check_branch
      %43 = sbr.rel (0) target = $region13
    $region12: #{tpu_custom_call.1} parent=1 // pred_region
      %44 = dma.done [#allocation4], 256
    $region13: #{tpu_custom_call.1} parent=1 // pred_fallthru
      _
    // Predicated region
    $region14: #{tpu_custom_call.1} parent=1 // pred_check
      _
    $region15: #{tpu_custom_call.1} parent=1 // pred_check_branch
      %46 = sbr.rel (0) target = $region17
    $region16: #{tpu_custom_call.1} parent=1 // pred_region
      %47 = dma.done [#allocation7], 256
    $region17: #{tpu_custom_call.1} parent=1 // pred_fallthru
      _
    %s48 = sadd.s32 0, 0
    %s49 = smul.u32 2, %s48
    %s50 = sadd.s32 0, 0
    %s51 = smul.u32 2, %s50
    %p52 = scmp.eq.s32.totalorder 0, 0
    // Predicated region
    $region18: #{tpu_custom_call.1} parent=1 // pred_check
      %p53 = pneg %p52
    $region19: #{tpu_custom_call.1} parent=1 // pred_check_branch
      %55 = sbr.rel (%p53) target = $region21
    $region20: #{tpu_custom_call.1} parent=1 // pred_region
      %56 = vst [vmem:[#allocation2] sm:$0xff] 0.0
    $region21: #{tpu_custom_call.1} parent=1 // pred_fallthru
      _
    %v57 = vld [vmem:[#allocation3] sm:$0xff]
    %v58 = vld [vmem:[#allocation3 + $0x8] sm:$0xff]
    %v59 = vld [vmem:[#allocation6] sm:$0xff]
    %v60 = vld [vmem:[#allocation6 + $0x8] sm:$0xff]
    %v61 = vsub.f32 %v57, %v59
    %v62 = vsub.f32 %v58, %v60
    %v63 = vand.u32 2147483647, %v61
    %v64 = vand.u32 2147483647, %v62
    %v65 = vld [vmem:[#allocation2] sm:$0xff]
    %v66 = vadd.f32 %v63, %v64
    %v67 = vadd.f32 %v65, %v66
    %68 = vst [vmem:[#allocation2] sm:$0xff] %v67
    // Predicated region
    $region22: #{tpu_custom_call.1} parent=1 // pred_check
      %p69 = pneg %p52
    $region23: #{tpu_custom_call.1} parent=1 // pred_check_branch
      %71 = sbr.rel (%p69) target = $region25
    $region24: #{tpu_custom_call.1} parent=1 // pred_region
      %v72 = vld [vmem:[#allocation2] sm:$0xff]
      %73 = vst [vmem:[#allocation8] sm:$0xff] %v72
    $region25: #{tpu_custom_call.1} parent=1 // pred_fallthru
      _
    // Predicated region
    $region26: #{tpu_custom_call.1} parent=1 // pred_check
      _
    $region27: #{tpu_custom_call.1} parent=1 // pred_check_branch
      %75 = sbr.rel (0) target = $region29
    $region28: #{tpu_custom_call.1} parent=1 // pred_region
      %s77 = ssub.s32 128, 128
      %78 = vsyncadd [#allocation5], %s77
      %s80 = sshll.u32 [#allocation8], 4
      %s81 = int_to_ptr.vmem [resolvable:$true] %s80
      %83 = dma.vmem_to_hbm [thread:$0]  %s81, 128, %s2, [#allocation5]
    $region29: #{tpu_custom_call.1} parent=1 // pred_fallthru
      _
    // Predicated region
    $region30: #{tpu_custom_call.1} parent=1 // pred_check
      _
    $region31: #{tpu_custom_call.1} parent=1 // pred_check_branch
      %85 = sbr.rel (0) target = $region33
    $region32: #{tpu_custom_call.1} parent=1 // pred_region
      %86 = dma.done [#allocation5], 128
    $region33: #{tpu_custom_call.1} parent=1 // pred_fallthru
      _
    %87 = vsyncpa [#allocation4], 1
    %88 = vsyncpa [#allocation7], 1
    %89 = vsyncpa [#allocation5], 1

</llo_original>
